<compile_context>
chip_gen: v7x
topology: tpu7x:2x2x1
jax: 0.10.0
libtpu: 0.0.40
codegen_flags: <defaults>
</compile_context>

<pallas_src>
import jax
import jax.numpy as jnp
import numpy as np
from jax.experimental import pallas as pl
from jax.experimental.pallas import tpu as pltpu

HIDDEN = 32   # A3TGCN2 out_channels inside TemporalGNN
LANE = 128


# ----------------------------------------------------------------------------
# Kernel: one row-block of the fused forward.
#   x        (B*N, T*F)   bf16   node features, all periods, all batches
#   adj      (rows, B*N)  bf16   row block of kron(I_B, D^-1/2 (A+I) D^-1/2)
#   w_big    (T*F, 2*T*H) bf16   block-diag fused GCN->gate weights [z | h]
#   b_big    (1, 2*T*H)   f32    fused biases
#   p_mat    (T*H, H)     bf16   softmax(attention) ⊗ I_H
#   w_out    (H, P_pad)   bf16   final Linear weight, lane-padded
#   b_out    (1, P_pad)   f32    final Linear bias, lane-padded
#   out      (rows, P_pad) f32
# ----------------------------------------------------------------------------
def _tgnn_kernel(x_ref, adj_ref, w_big_ref, b_big_ref, p_ref,
                 w_out_ref, b_out_ref, out_ref):
    # Graph aggregation for every period / batch at once (bf16 MXU, f32 acc).
    ax = jnp.dot(adj_ref[...], x_ref[...],
                 preferred_element_type=jnp.float32)                  # (rows, T*F)

    # Fused GCN->gate linear for all periods and both live gates at once.
    # Column layout: [z_t0 | ... | z_t{T-1} | h_t0 | ... | h_t{T-1}].
    gates = (jnp.dot(ax.astype(jnp.bfloat16), w_big_ref[...],
                     preferred_element_type=jnp.float32)
             + b_big_ref[...])                                        # (rows, 2*T*H)

    th = b_big_ref.shape[-1] // 2                                     # T*H (mult of 128)
    z = jax.nn.sigmoid(gates[:, :th])                                 # f32 EUP/VPU
    h_tilde = jnp.tanh(gates[:, th:])
    h_new = (1.0 - z) * h_tilde                                       # (rows, T*H)

    # Attention-weighted sum over periods as one matmul: P = softmax(att) ⊗ I_H.
    h_acc = jnp.dot(h_new.astype(jnp.bfloat16), p_ref[...],
                    preferred_element_type=jnp.float32)               # (rows, H)

    h = jnp.maximum(h_acc, 0.0)                                       # F.relu
    out = (jnp.dot(h.astype(jnp.bfloat16), w_out_ref[...],
                   preferred_element_type=jnp.float32)
           + b_out_ref[...])                                          # (rows, P_pad)
    out_ref[...] = out.astype(out_ref.dtype)


# ----------------------------------------------------------------------------
# Wrapper-side constant packing (run ONCE per (params, edge_index)).
# ----------------------------------------------------------------------------
def gcn_norm_dense(edge_index, num_nodes):
    """Dense GCN-normalized adjacency: D^-1/2 (A + I) D^-1/2 (add_self_loops)."""
    src = edge_index[0]
    dst = edge_index[1]
    a = jnp.zeros((num_nodes, num_nodes), jnp.float32)
    a = a.at[dst, src].add(1.0)                 # message flows src -> dst
    a = a + jnp.eye(num_nodes, dtype=jnp.float32)
    deg = jnp.sum(a, axis=1)
    dinv = jnp.where(deg > 0.0, jax.lax.rsqrt(deg), 0.0)
    return dinv[:, None] * a * dinv[None, :]


def prepare_constants(edge_index, params, *, batch, num_nodes, node_features,
                      periods):
    """All x-independent operands: weight fusion, block-diag expansion,
    attention folding, lane padding, bf16 casts.  Algebraically exact
    (H=None => hidden state is 0, r-gate dead)."""
    H = HIDDEN
    t, f = periods, node_features

    adj = gcn_norm_dense(edge_index, num_nodes)
    adj_big = jnp.kron(jnp.eye(batch, dtype=jnp.float32), adj)        # (B*N, B*N)

    # Fold GCNConv weight/bias into the gate Linear (dead h0 half dropped).
    wz_gate = params["w_gate"][0][:H, :]
    wh_gate = params["w_gate"][2][:H, :]
    wz = params["w_gcn"][0] @ wz_gate                                 # (F, H)
    wh = params["w_gcn"][2] @ wh_gate                                 # (F, H)
    bz = params["b_gcn"][0] @ wz_gate + params["b_gate"][0]           # (H,)
    bh = params["b_gcn"][2] @ wh_gate + params["b_gate"][2]           # (H,)

    eye_t = jnp.eye(t, dtype=jnp.float32)
    w_big = jnp.concatenate(
        [jnp.kron(eye_t, wz), jnp.kron(eye_t, wh)], axis=1)           # (T*F, 2*T*H)
    b_big = jnp.concatenate([jnp.tile(bz, t), jnp.tile(bh, t)])[None, :]

    # Attention softmax folded into a (T*H, H) operand: block t = probs[t]*I.
    probs = jax.nn.softmax(params["attention"])
    p_mat = jnp.kron(probs[:, None], jnp.eye(H, dtype=jnp.float32))   # (T*H, H)

    # Lane-dense final Linear: pad output columns to a multiple of 128.
    p_pad = max(LANE, ((periods + LANE - 1) // LANE) * LANE)
    w_out_pad = jnp.zeros((H, p_pad), jnp.float32).at[:, :periods].set(
        params["w_out"])
    b_out_pad = jnp.zeros((1, p_pad), jnp.float32).at[:, :periods].set(
        params["b_out"])

    return {
        "adj_big": adj_big.astype(jnp.bfloat16),
        "w_big": w_big.astype(jnp.bfloat16),
        "b_big": b_big,                                 # f32 (added post-matmul)
        "p_mat": p_mat.astype(jnp.bfloat16),
        "w_out": w_out_pad.astype(jnp.bfloat16),
        "b_out": b_out_pad,                             # f32
    }


def _pick_row_blocks(total_rows):
    """2 parallel row blocks on v7x (2 TCs/chip), 1 step on v5e/v6e."""
    try:
        kind = jax.devices()[0].device_kind.lower()
    except Exception:
        kind = ""
    if "v7" in kind and total_rows % 16 == 0:
        return 2
    return 1


# ----------------------------------------------------------------------------
# Forward (hot path): only x-dependent packing + the pallas_call.
# ----------------------------------------------------------------------------
def temporal_gnn_forward(x, consts, periods):
    b, n, f, t = x.shape
    H = HIDDEN
    bn = b * n
    tf_ = t * f
    p_pad = consts["w_out"].shape[1]

    # x: (B, N, F, T) -> (B*N, T*F), columns ordered (t, f) to match w_big.
    x_flat = jnp.transpose(x, (0, 1, 3, 2)).reshape(bn, tf_).astype(jnp.bfloat16)

    nb = _pick_row_blocks(bn)
    rpb = bn // nb

    flops = 2 * bn * (bn * tf_ + tf_ * 2 * t * H + t * H * H + H * p_pad)
    transcendentals = bn * 2 * t * H                       # sigmoid + tanh
    bytes_accessed = (
        2 * bn * tf_ + 2 * bn * bn + 2 * tf_ * 2 * t * H + 4 * 2 * t * H
        + 2 * t * H * H + 2 * H * p_pad + 4 * p_pad + 4 * bn * p_pad)

    grid_spec = pltpu.PrefetchScalarGridSpec(
        num_scalar_prefetch=0,
        grid=(nb,),
        in_specs=[
            pl.BlockSpec((bn, tf_), lambda i: (0, 0)),            # x (all rows)
            pl.BlockSpec((rpb, bn), lambda i: (i, 0)),            # adj row block
            pl.BlockSpec((tf_, 2 * t * H), lambda i: (0, 0)),     # fused gate W
            pl.BlockSpec((1, 2 * t * H), lambda i: (0, 0)),       # fused gate b
            pl.BlockSpec((t * H, H), lambda i: (0, 0)),           # attention ⊗ I
            pl.BlockSpec((H, p_pad), lambda i: (0, 0)),           # final W (padded)
            pl.BlockSpec((1, p_pad), lambda i: (0, 0)),           # final b (padded)
        ],
        out_specs=pl.BlockSpec((rpb, p_pad), lambda i: (i, 0)),
    )
    out_flat = pl.pallas_call(
        _tgnn_kernel,
        out_shape=jax.ShapeDtypeStruct((bn, p_pad), jnp.float32),
        grid_spec=grid_spec,
        compiler_params=pltpu.CompilerParams(
            dimension_semantics=("parallel",)),
        cost_estimate=pl.CostEstimate(flops=flops,
                                      transcendentals=transcendentals,
                                      bytes_accessed=bytes_accessed),
    )(x_flat, consts["adj_big"], consts["w_big"], consts["b_big"],
      consts["p_mat"], consts["w_out"], consts["b_out"])

    return out_flat.reshape(b, n, p_pad)[..., :periods]


# ----------------------------------------------------------------------------
# Pure-JAX reference: the ORIGINAL unfused A3TGCN2/TGCN2 math (f32 throughout).
# ----------------------------------------------------------------------------
def temporal_gnn_reference(x, edge_index, params):
    b, n, f, t = x.shape
    adj = gcn_norm_dense(edge_index, n)
    probs = jax.nn.softmax(params["attention"])
    h_acc = jnp.zeros((b, n, HIDDEN), jnp.float32)
    for ti in range(t):
        xt = x[:, :, :, ti]
        conv = [jnp.einsum("nm,bmh->bnh", adj, xt @ params["w_gcn"][g])
                + params["b_gcn"][g] for g in range(3)]
        h0 = jnp.zeros((b, n, HIDDEN), jnp.float32)
        z = jax.nn.sigmoid(jnp.concatenate([conv[0], h0], -1) @ params["w_gate"][0]
                           + params["b_gate"][0])
        r = jax.nn.sigmoid(jnp.concatenate([conv[1], h0], -1) @ params["w_gate"][1]
                           + params["b_gate"][1])
        h_tilde = jnp.tanh(jnp.concatenate([conv[2], h0 * r], -1) @ params["w_gate"][2]
                           + params["b_gate"][2])
        h_acc = h_acc + probs[ti] * (z * h0 + (1.0 - z) * h_tilde)
    h = jax.nn.relu(h_acc)
    return h @ params["w_out"] + params["b_out"]


def init_params(node_features, periods, key):
    ks = jax.random.split(key, 6)

    def glorot(k, shape):
        fan_in, fan_out = shape[-2], shape[-1]
        lim = (6.0 / (fan_in + fan_out)) ** 0.5
        return jax.random.uniform(k, shape, jnp.float32, -lim, lim)

    return {
        # A3TGCN2 attention over periods (torch init: uniform_)
        "attention": jax.random.uniform(ks[0], (periods,), jnp.float32),
        # GCNConv for z, r, h gates: weight (F, 32), bias (32,)
        "w_gcn": glorot(ks[1], (3, node_features, HIDDEN)),
        "b_gcn": jnp.zeros((3, HIDDEN), jnp.float32),
        # torch.nn.Linear(2*32, 32) for z, r, h (stored pre-transposed: x @ W)
        "w_gate": glorot(ks[2], (3, 2 * HIDDEN, HIDDEN)),
        "b_gate": 0.01 * jax.random.normal(ks[3], (3, HIDDEN), jnp.float32),
        # final torch.nn.Linear(32, periods) (stored pre-transposed)
        "w_out": glorot(ks[4], (HIDDEN, periods)),
        "b_out": 0.01 * jax.random.normal(ks[5], (1, periods), jnp.float32),
    }


if __name__ == "__main__":
    key = jax.random.PRNGKey(0)
    k_x, k_p = jax.random.split(key)

    # Small, module-consistent shapes: batch=2, nodes=16, node_features=4, periods=8
    B, N, F_IN, T = 2, 16, 4, 8
    x = jax.random.normal(k_x, (B, N, F_IN, T), jnp.float32)

    # Simple bidirectional ring graph as edge_index (2, E)
    src = np.arange(N, dtype=np.int32)
    dst = (src + 1) % N
    edge_index = jnp.asarray(
        np.stack([np.concatenate([src, dst]), np.concatenate([dst, src])]),
        dtype=jnp.int32)

    params = init_params(F_IN, T, k_p)

    # Constant packing hoisted out of the hot path: computed once, reused.
    consts = prepare_constants(edge_index, params, batch=B, num_nodes=N,
                               node_features=F_IN, periods=T)
    consts = jax.tree_util.tree_map(jax.block_until_ready, consts)

    fwd = jax.jit(temporal_gnn_forward, static_argnums=(2,))
    out = jax.block_until_ready(fwd(x, consts, T))

    # Validate against the unfused f32 reference (bf16 matmul operands ->
    # slightly relaxed tolerance vs. the pure-f32 path).
    ref = temporal_gnn_reference(x, edge_index, params)
    np.testing.assert_allclose(np.asarray(out), np.asarray(ref),
                               rtol=2e-2, atol=2e-2)

    print("KERNEL_OK")
</pallas_src>

<mosaic_0001>
module attributes {stable_mosaic.version = 11 : i64} {
  func.func @_tgnn_kernel(%arg0: i32, %arg1: memref<32x32xbf16, #tpu.memory_space<vmem>>, %arg2: memref<32x32xbf16, #tpu.memory_space<vmem>>, %arg3: memref<32x512xbf16, #tpu.memory_space<vmem>>, %arg4: memref<1x512xf32, #tpu.memory_space<vmem>>, %arg5: memref<256x32xbf16, #tpu.memory_space<vmem>>, %arg6: memref<32x128xbf16, #tpu.memory_space<vmem>>, %arg7: memref<1x128xf32, #tpu.memory_space<vmem>>, %arg8: memref<32x128xf32, #tpu.memory_space<vmem>>) attributes {dimension_semantics = [#tpu.dimension_semantics<parallel>], iteration_bounds = array<i64: 1>, scalar_prefetch = 0 : i64, scratch_operands = 0 : i64, tpu.core_type = #tpu.core_type<tc>, window_params = [{pipeline_mode = #tpu.pipeline_mode<synchronous>, transform_indices = @transform_0, window_bounds = array<i64: 32, 32>}, {transform_indices = @transform_1, window_bounds = array<i64: 32, 32>}, {pipeline_mode = #tpu.pipeline_mode<synchronous>, transform_indices = @transform_2, window_bounds = array<i64: 32, 512>}, {pipeline_mode = #tpu.pipeline_mode<synchronous>, transform_indices = @transform_3, window_bounds = array<i64: 1, 512>}, {pipeline_mode = #tpu.pipeline_mode<synchronous>, transform_indices = @transform_4, window_bounds = array<i64: 256, 32>}, {pipeline_mode = #tpu.pipeline_mode<synchronous>, transform_indices = @transform_5, window_bounds = array<i64: 32, 128>}, {pipeline_mode = #tpu.pipeline_mode<synchronous>, transform_indices = @transform_6, window_bounds = array<i64: 1, 128>}, {transform_indices = @transform_7, window_bounds = array<i64: 32, 128>}]} {
    %c0 = arith.constant 0 : index
    %c0_0 = arith.constant 0 : index
    %0 = vector.load %arg2[%c0, %c0_0] : memref<32x32xbf16, #tpu.memory_space<vmem>>, vector<32x32xbf16>
    %c0_1 = arith.constant 0 : index
    %c0_2 = arith.constant 0 : index
    %1 = vector.load %arg1[%c0_1, %c0_2] : memref<32x32xbf16, #tpu.memory_space<vmem>>, vector<32x32xbf16>
    %cst = arith.constant dense<0.000000e+00> : vector<32x32xf32>
    %2 = tpu.matmul %0, %1, %cst {dimension_numbers = #tpu.dot_dimension_numbers<[1], [0], [0], [1], [0, 0, 1, 1], [], []>} : vector<32x32xbf16>, vector<32x32xbf16>, vector<32x32xf32> -> vector<32x32xf32>
    %3 = arith.truncf %2 : vector<32x32xf32> to vector<32x32xbf16>
    %c0_3 = arith.constant 0 : index
    %c0_4 = arith.constant 0 : index
    %4 = vector.load %arg3[%c0_3, %c0_4] : memref<32x512xbf16, #tpu.memory_space<vmem>>, vector<32x512xbf16>
    %cst_5 = arith.constant dense<0.000000e+00> : vector<32x512xf32>
    %5 = tpu.matmul %3, %4, %cst_5 {dimension_numbers = #tpu.dot_dimension_numbers<[1], [0], [0], [1], [0, 0, 1, 1], [], []>} : vector<32x32xbf16>, vector<32x512xbf16>, vector<32x512xf32> -> vector<32x512xf32>
    %c0_6 = arith.constant 0 : index
    %c0_7 = arith.constant 0 : index
    %6 = vector.load %arg4[%c0_6, %c0_7] : memref<1x512xf32, #tpu.memory_space<vmem>>, vector<1x512xf32>
    %7 = vector.broadcast %6 : vector<1x512xf32> to vector<32x512xf32>
    %8 = arith.addf %5, %7 : vector<32x512xf32>
    %9 = vector.extract_strided_slice %8 {offsets = [0, 0], sizes = [32, 256], strides = [1, 1]} : vector<32x512xf32> to vector<32x256xf32>
    %10 = arith.negf %9 : vector<32x256xf32>
    %11 = math.exp %10 : vector<32x256xf32>
    %cst_8 = arith.constant 1.000000e+00 : f32
    %12 = vector.broadcast %cst_8 : f32 to vector<32x256xf32>
    %13 = arith.addf %12, %11 : vector<32x256xf32>
    %14 = arith.divf %12, %13 : vector<32x256xf32>
    %15 = vector.extract_strided_slice %8 {offsets = [0, 256], sizes = [32, 256], strides = [1, 1]} : vector<32x512xf32> to vector<32x256xf32>
    %16 = math.tanh %15 : vector<32x256xf32>
    %cst_9 = arith.constant 1.000000e+00 : f32
    %17 = vector.broadcast %cst_9 : f32 to vector<32x256xf32>
    %18 = arith.subf %17, %14 : vector<32x256xf32>
    %19 = arith.mulf %18, %16 : vector<32x256xf32>
    %20 = arith.truncf %19 : vector<32x256xf32> to vector<32x256xbf16>
    %c0_10 = arith.constant 0 : index
    %c0_11 = arith.constant 0 : index
    %21 = vector.load %arg5[%c0_10, %c0_11] : memref<256x32xbf16, #tpu.memory_space<vmem>>, vector<256x32xbf16>
    %cst_12 = arith.constant dense<0.000000e+00> : vector<32x32xf32>
    %22 = tpu.matmul %20, %21, %cst_12 {dimension_numbers = #tpu.dot_dimension_numbers<[1], [0], [0], [1], [0, 0, 1, 1], [], []>} : vector<32x256xbf16>, vector<256x32xbf16>, vector<32x32xf32> -> vector<32x32xf32>
    %cst_13 = arith.constant 0.000000e+00 : f32
    %23 = vector.broadcast %cst_13 : f32 to vector<32x32xf32>
    %24 = arith.maximumf %22, %23 : vector<32x32xf32>
    %25 = arith.truncf %24 : vector<32x32xf32> to vector<32x32xbf16>
    %c0_14 = arith.constant 0 : index
    %c0_15 = arith.constant 0 : index
    %26 = vector.load %arg6[%c0_14, %c0_15] : memref<32x128xbf16, #tpu.memory_space<vmem>>, vector<32x128xbf16>
    %cst_16 = arith.constant dense<0.000000e+00> : vector<32x128xf32>
    %27 = tpu.matmul %25, %26, %cst_16 {dimension_numbers = #tpu.dot_dimension_numbers<[1], [0], [0], [1], [0, 0, 1, 1], [], []>} : vector<32x32xbf16>, vector<32x128xbf16>, vector<32x128xf32> -> vector<32x128xf32>
    %c0_17 = arith.constant 0 : index
    %c0_18 = arith.constant 0 : index
    %28 = vector.load %arg7[%c0_17, %c0_18] : memref<1x128xf32, #tpu.memory_space<vmem>>, vector<1x128xf32>
    %29 = vector.broadcast %28 : vector<1x128xf32> to vector<32x128xf32>
    %30 = arith.addf %27, %29 : vector<32x128xf32>
    %c0_19 = arith.constant 0 : index
    %c0_20 = arith.constant 0 : index
    %31 = vector.load %arg8[%c0_19, %c0_20] : memref<32x128xf32, #tpu.memory_space<vmem>>, vector<32x128xf32>
    tpu.vector_store %arg8[%c0_19, %c0_20], %30 {strides = array<i32>} : memref<32x128xf32, #tpu.memory_space<vmem>>, vector<32x128xf32>,
    return
  }
  func.func @transform_0(%arg0: i32) -> (i32, i32) {
    %c0_i32 = arith.constant 0 : i32
    %c0_i32_0 = arith.constant 0 : i32
    %c0_i32_1 = arith.constant 0 : i32
    return %c0_i32, %c0_i32_0 : i32, i32
  }
  func.func @transform_1(%arg0: i32) -> (i32, i32) {
    %c0_i32 = arith.constant 0 : i32
    %c0_i32_0 = arith.constant 0 : i32
    return %arg0, %c0_i32 : i32, i32
  }
  func.func @transform_2(%arg0: i32) -> (i32, i32) {
    %c0_i32 = arith.constant 0 : i32
    %c0_i32_0 = arith.constant 0 : i32
    %c0_i32_1 = arith.constant 0 : i32
    return %c0_i32, %c0_i32_0 : i32, i32
  }
  func.func @transform_3(%arg0: i32) -> (i32, i32) {
    %c0_i32 = arith.constant 0 : i32
    %c0_i32_0 = arith.constant 0 : i32
    %c0_i32_1 = arith.constant 0 : i32
    return %c0_i32, %c0_i32_0 : i32, i32
  }
  func.func @transform_4(%arg0: i32) -> (i32, i32) {
    %c0_i32 = arith.constant 0 : i32
    %c0_i32_0 = arith.constant 0 : i32
    %c0_i32_1 = arith.constant 0 : i32
    return %c0_i32, %c0_i32_0 : i32, i32
  }
  func.func @transform_5(%arg0: i32) -> (i32, i32) {
    %c0_i32 = arith.constant 0 : i32
    %c0_i32_0 = arith.constant 0 : i32
    %c0_i32_1 = arith.constant 0 : i32
    return %c0_i32, %c0_i32_0 : i32, i32
  }
  func.func @transform_6(%arg0: i32) -> (i32, i32) {
    %c0_i32 = arith.constant 0 : i32
    %c0_i32_0 = arith.constant 0 : i32
    %c0_i32_1 = arith.constant 0 : i32
    return %c0_i32, %c0_i32_0 : i32, i32
  }
  func.func @transform_7(%arg0: i32) -> (i32, i32) {
    %c0_i32 = arith.constant 0 : i32
    %c0_i32_0 = arith.constant 0 : i32
    return %arg0, %c0_i32 : i32, i32
  }
}

</mosaic_0001>

<llo_original>
// kernel: temporal_gnn_forward.1
$region0: #{temporal_gnn_forward.1}
  #allocation0 [shape = 'u32[]', space=smem, size = 0x4, offset = 0x4, fixed_abs, tag = 'smem constant byte address 0x4 - core index']
  #allocation1 [shape = 'u32[144,128]{1,0:T(1,128)}', space=vmem, size = 0x12000, scoped, tag = 'internal scratch']
  %s0 = inlined_call_operand.vmem [shape: bf16[32,32], index: 0, kind: input, shape index: {}]
  %s1 = inlined_call_operand.vmem [shape: bf16[32,32], index: 1, kind: input, shape index: {}]
  %s2 = inlined_call_operand.vmem [shape: bf16[32,512], index: 2, kind: input, shape index: {}]
  %s3 = inlined_call_operand.vmem [shape: f32[1,512], index: 3, kind: input, shape index: {}]
  %s4 = inlined_call_operand.vmem [shape: bf16[256,32], index: 4, kind: input, shape index: {}]
  %s5 = inlined_call_operand.vmem [shape: bf16[32,128], index: 5, kind: input, shape index: {}]
  %s6 = inlined_call_operand.vmem [shape: f32[1,128], index: 6, kind: input, shape index: {}]
  %s7 = inlined_call_operand.vmem [shape: f32[32,128], index: 7, kind: output, shape index: {}]
  %s8 = sld [smem:[#allocation0]]
  $region38: #{temporal_gnn_forward.1} parent=0
    _
  %s10 = ssub.s32 1, %s8
  %s11 = scalar_select 0, %s10, %s8
  // Predicated region
  $region2: #{temporal_gnn_forward.1} parent=0 // pred_check
    _
  $region3: #{temporal_gnn_forward.1} parent=0 // pred_check_branch
    %13 = sbr.rel (0) target = $region5
  $region4: #{temporal_gnn_forward.1} parent=0 // pred_region
    _
  $region5: #{temporal_gnn_forward.1} parent=0 // pred_fallthru
    _
  // Predicated region
  $region6: #{temporal_gnn_forward.1} parent=0 // pred_check
    _
  $region7: #{temporal_gnn_forward.1} parent=0 // pred_check_branch
    %15 = sbr.rel (0) target = $region9
  $region8: #{temporal_gnn_forward.1} parent=0 // pred_region
    _
  $region9: #{temporal_gnn_forward.1} parent=0 // pred_fallthru
    _
  // Predicated region
  $region10: #{temporal_gnn_forward.1} parent=0 // pred_check
    _
  $region11: #{temporal_gnn_forward.1} parent=0 // pred_check_branch
    %17 = sbr.rel (0) target = $region13
  $region12: #{temporal_gnn_forward.1} parent=0 // pred_region
    _
  $region13: #{temporal_gnn_forward.1} parent=0 // pred_fallthru
    _
  // Predicated region
  $region14: #{temporal_gnn_forward.1} parent=0 // pred_check
    _
  $region15: #{temporal_gnn_forward.1} parent=0 // pred_check_branch
    %19 = sbr.rel (0) target = $region17
  $region16: #{temporal_gnn_forward.1} parent=0 // pred_region
    _
  $region17: #{temporal_gnn_forward.1} parent=0 // pred_fallthru
    _
  // Predicated region
  $region18: #{temporal_gnn_forward.1} parent=0 // pred_check
    _
  $region19: #{temporal_gnn_forward.1} parent=0 // pred_check_branch
    %21 = sbr.rel (0) target = $region21
  $region20: #{temporal_gnn_forward.1} parent=0 // pred_region
    _
  $region21: #{temporal_gnn_forward.1} parent=0 // pred_fallthru
    _
  // Predicated region
  $region22: #{temporal_gnn_forward.1} parent=0 // pred_check
    _
  $region23: #{temporal_gnn_forward.1} parent=0 // pred_check_branch
    %23 = sbr.rel (0) target = $region25
  $region24: #{temporal_gnn_forward.1} parent=0 // pred_region
    _
  $region25: #{temporal_gnn_forward.1} parent=0 // pred_fallthru
    _
  // Predicated region
  $region26: #{temporal_gnn_forward.1} parent=0 // pred_check
    _
  $region27: #{temporal_gnn_forward.1} parent=0 // pred_check_branch
    %25 = sbr.rel (0) target = $region29
  $region28: #{temporal_gnn_forward.1} parent=0 // pred_region
    _
  $region29: #{temporal_gnn_forward.1} parent=0 // pred_fallthru
    _
  %v27 = vld [vmem:[%s1] sm:$0xf]
  %v28 = vld [vmem:[%s1 + $0x4] sm:$0xf]
  %v29 = vld [vmem:[%s1 + $0x8] sm:$0xf]
  %v30 = vld [vmem:[%s1 + $0xc] sm:$0xf]
  %v31 = vld [vmem:[%s0] sm:$0xf]
  %v32 = vld [vmem:[%s0 + $0x4] sm:$0xf]
  %v33 = vld [vmem:[%s0 + $0x8] sm:$0xf]
  %v34 = vld [vmem:[%s0 + $0xc] sm:$0xf]
  %v39 = vunpack.c.l.b16 %v27
  %v40 = vunpack.c.l.b16 %v28
  %v41 = vunpack.c.l.b16 %v29
  %v42 = vunpack.c.l.b16 %v30
  %v43 = vpack.c.b16 %v40, %v39
  %v44 = vpack.c.b16 %v42, %v41
  %v49 = vunpack.c.l.b16 %v31
  %v50 = vunpack.c.l.b16 %v32
  %v51 = vunpack.c.l.b16 %v33
  %v52 = vunpack.c.l.b16 %v34
  %v53 = vpack.c.b16 %v50, %v49
  %v54 = vpack.c.b16 %v52, %v51
  %vm57 = vcmask 261120
  %v59 = vsel %vm57, %v43, 0
  %v62 = vsel %vm57, %v44, 0
  %64 = vmatprep.subr.bf16.mxu0 0
  %65 = vmatpush1.bf16.msra.mxu0 %v53
  %66 = vmatprep.subr.bf16.mxu0 0
  %67 = vmatpush1.bf16.msra.mxu0 %v54
  %68 = vmatprep.subr.bf16.mxu0 0
  %69 = vmatpush1.bf16.msra.mxu0 0
  %70 = vmatprep.subr.bf16.mxu0 0
  %71 = vmatpush1.bf16.msra.mxu0 0
  %72 = vmatprep.subr.bf16.mxu0 0
  %73 = vmatpush1.bf16.msra.mxu0 0
  %74 = vmatprep.subr.bf16.mxu0 0
  %75 = vmatpush1.bf16.msra.mxu0 0
  %76 = vmatprep.subr.bf16.mxu0 0
  %77 = vmatpush1.bf16.msra.mxu0 0
  %78 = vmatprep.subr.bf16.mxu0 0
  %79 = vmatpush1.bf16.msra.mxu0 0
  %80 = vmatprep.subr.bf16.mxu0 0
  %81 = vmatpush1.bf16.msra.mxu0 0
  %82 = vmatprep.subr.bf16.mxu0 0
  %83 = vmatpush1.bf16.msra.mxu0 0
  %84 = vmatprep.subr.bf16.mxu0 0
  %85 = vmatpush1.bf16.msra.mxu0 0
  %86 = vmatprep.subr.bf16.mxu0 0
  %87 = vmatpush1.bf16.msra.mxu0 0
  %88 = vmatprep.subr.bf16.mxu0 0
  %89 = vmatpush1.bf16.msra.mxu0 0
  %90 = vmatprep.subr.bf16.mxu0 0
  %91 = vmatpush1.bf16.msra.mxu0 0
  %92 = vmatprep.subr.bf16.mxu0 0
  %93 = vmatpush1.bf16.msra.mxu0 0
  %94 = vmatprep.subr.bf16.mxu0 0
  %95 = vmatpush1.bf16.msra.mxu0 0
  %96 = vmatprep.mubr.bf16.mxu0 0
  %97 = vmatmul.mubr.bf16.gmra.mrb[0].mxu0 %v59
  %v98 = vpop.f32.mrb[0].mxu0
  %v99 = vadd.f32 0.0, %v98
  %v100 = vpop.f32.mrb[0].mxu0
  %v101 = vpop.f32.mrb[0].mxu0
  %v102 = vadd.f32 0.0, %v101
  %v103 = vpop.f32.mrb[0].mxu0
  %104 = vmatprep.mubr.bf16.mxu0 0
  %105 = vmatmul.mubr.bf16.gmra.mrb[0].mxu0 %v62
  %v106 = vpop.f32.mrb[0].mxu0
  %v107 = vadd.f32 0.0, %v106
  %v108 = vpop.f32.mrb[0].mxu0
  %v109 = vpop.f32.mrb[0].mxu0
  %v110 = vadd.f32 0.0, %v109
  %v111 = vpop.f32.mrb[0].mxu0
  %112 = vdwg.mxu0
  %v113 = vpack.c.bf16 %v102, %v99
  %v114 = vpack.c.bf16 %v110, %v107
  %v115 = vld [vmem:[%s2] sm:$0xff]
  %v116 = vld [vmem:[%s2 + $0x8] sm:$0xff]
  %v117 = vld [vmem:[%s2 + $0x10] sm:$0xff]
  %v118 = vld [vmem:[%s2 + $0x18] sm:$0xff]
  %v119 = vld [vmem:[%s2 + $0x20] sm:$0xff]
  %v120 = vld [vmem:[%s2 + $0x28] sm:$0xff]
  %v121 = vld [vmem:[%s2 + $0x30] sm:$0xff]
  %v122 = vld [vmem:[%s2 + $0x38] sm:$0xff]
  %v123 = vld [vmem:[%s3] sm:$0xf]
  %v125 = vlaneseq
  %v126 = vshrl.u32 %v125, 7
  %v127 = vsub.s32 0, %v126
  %v128 = vrot.slane %v123, %v127
  %v129 = vlaneseq
  %v130 = vshrl.u32 %v129, 7
  %v131 = vsub.s32 1, %v130
  %v132 = vrot.slane %v123, %v131
  %v133 = vlaneseq
  %v134 = vshrl.u32 %v133, 7
  %v135 = vsub.s32 2, %v134
  %v136 = vrot.slane %v123, %v135
  %v137 = vlaneseq
  %v138 = vshrl.u32 %v137, 7
  %v139 = vsub.s32 3, %v138
  %v140 = vrot.slane %v123, %v139
  %v153 = vunpack.c.l.b16 %v115
  %v154 = vunpack.c.h.b16 %v115
  %v155 = vunpack.c.l.b16 %v116
  %v156 = vunpack.c.h.b16 %v116
  %v157 = vunpack.c.l.b16 %v117
  %v158 = vunpack.c.h.b16 %v117
  %v159 = vunpack.c.l.b16 %v118
  %v160 = vunpack.c.h.b16 %v118
  %v161 = vunpack.c.l.b16 %v119
  %v162 = vunpack.c.h.b16 %v119
  %v163 = vunpack.c.l.b16 %v120
  %v164 = vunpack.c.h.b16 %v120
  %v165 = vunpack.c.l.b16 %v121
  %v166 = vunpack.c.h.b16 %v121
  %v167 = vunpack.c.l.b16 %v122
  %v168 = vunpack.c.h.b16 %v122
  %v169 = vpack.c.b16 %v157, %v153
  %v170 = vpack.c.b16 %v158, %v154
  %v171 = vpack.c.b16 %v159, %v155
  %v172 = vpack.c.b16 %v160, %v156
  %v173 = vpack.c.b16 %v165, %v161
  %v174 = vpack.c.b16 %v166, %v162
  %v175 = vpack.c.b16 %v167, %v163
  %v176 = vpack.c.b16 %v168, %v164
  %v186 = vsel %vm57, %v113, 0
  %v189 = vsel %vm57, %v114, 0
  %191 = vmatprep.subr.bf16.mxu0 %v170
  %192 = vmatpush1.bf16.msra.mxu0 %v169
  %193 = vmatprep.subr.bf16.mxu0 %v174
  %194 = vmatpush1.bf16.msra.mxu0 %v173
  %195 = vmatprep.subr.bf16.mxu0 0
  %196 = vmatpush1.bf16.msra.mxu0 0
  %197 = vmatprep.subr.bf16.mxu0 0
  %198 = vmatpush1.bf16.msra.mxu0 0
  %199 = vmatprep.subr.bf16.mxu0 0
  %200 = vmatpush1.bf16.msra.mxu0 0
  %201 = vmatprep.subr.bf16.mxu0 0
  %202 = vmatpush1.bf16.msra.mxu0 0
  %203 = vmatprep.subr.bf16.mxu0 0
  %204 = vmatpush1.bf16.msra.mxu0 0
  %205 = vmatprep.subr.bf16.mxu0 0
  %206 = vmatpush1.bf16.msra.mxu0 0
  %207 = vmatprep.subr.bf16.mxu0 0
  %208 = vmatpush1.bf16.msra.mxu0 0
  %209 = vmatprep.subr.bf16.mxu0 0
  %210 = vmatpush1.bf16.msra.mxu0 0
  %211 = vmatprep.subr.bf16.mxu0 0
  %212 = vmatpush1.bf16.msra.mxu0 0
  %213 = vmatprep.subr.bf16.mxu0 0
  %214 = vmatpush1.bf16.msra.mxu0 0
  %215 = vmatprep.subr.bf16.mxu0 0
  %216 = vmatpush1.bf16.msra.mxu0 0
  %217 = vmatprep.subr.bf16.mxu0 0
  %218 = vmatpush1.bf16.msra.mxu0 0
  %219 = vmatprep.subr.bf16.mxu0 0
  %220 = vmatpush1.bf16.msra.mxu0 0
  %221 = vmatprep.subr.bf16.mxu0 0
  %222 = vmatpush1.bf16.msra.mxu0 0
  %223 = vmatprep.mubr.bf16.mxu0 0
  %224 = vmatmul.mubr.bf16.gmra.mrb[0].mxu0 %v186
  %v225 = vpop.f32.mrb[0].mxu0
  %v226 = vadd.f32 %v128, %v225
  %v227 = vpop.f32.mrb[0].mxu0
  %v228 = vadd.f32 %v132, %v227
  %v229 = vpop.f32.mrb[0].mxu0
  %v230 = vadd.f32 %v128, %v229
  %v231 = vpop.f32.mrb[0].mxu0
  %v232 = vadd.f32 %v132, %v231
  %233 = vmatprep.mubr.bf16.mxu0 0
  %234 = vmatmul.mubr.bf16.gmra.mrb[0].mxu0 %v189
  %v235 = vpop.f32.mrb[0].mxu0
  %v236 = vadd.f32 %v128, %v235
  %v237 = vpop.f32.mrb[0].mxu0
  %v238 = vadd.f32 %v132, %v237
  %v239 = vpop.f32.mrb[0].mxu0
  %v240 = vadd.f32 %v128, %v239
  %v241 = vpop.f32.mrb[0].mxu0
  %v242 = vadd.f32 %v132, %v241
  %243 = vdwg.mxu0
  %244 = vmatprep.subr.bf16.mxu0 %v172
  %245 = vmatpush1.bf16.msra.mxu0 %v171
  %246 = vmatprep.subr.bf16.mxu0 %v176
  %247 = vmatpush1.bf16.msra.mxu0 %v175
  %248 = vmatprep.subr.bf16.mxu0 0
  %249 = vmatpush1.bf16.msra.mxu0 0
  %250 = vmatprep.subr.bf16.mxu0 0
  %251 = vmatpush1.bf16.msra.mxu0 0
  %252 = vmatprep.subr.bf16.mxu0 0
  %253 = vmatpush1.bf16.msra.mxu0 0
  %254 = vmatprep.subr.bf16.mxu0 0
  %255 = vmatpush1.bf16.msra.mxu0 0
  %256 = vmatprep.subr.bf16.mxu0 0
  %257 = vmatpush1.bf16.msra.mxu0 0
  %258 = vmatprep.subr.bf16.mxu0 0
  %259 = vmatpush1.bf16.msra.mxu0 0
  %260 = vmatprep.subr.bf16.mxu0 0
  %261 = vmatpush1.bf16.msra.mxu0 0
  %262 = vmatprep.subr.bf16.mxu0 0
  %263 = vmatpush1.bf16.msra.mxu0 0
  %264 = vmatprep.subr.bf16.mxu0 0
  %265 = vmatpush1.bf16.msra.mxu0 0
  %266 = vmatprep.subr.bf16.mxu0 0
  %267 = vmatpush1.bf16.msra.mxu0 0
  %268 = vmatprep.subr.bf16.mxu0 0
  %269 = vmatpush1.bf16.msra.mxu0 0
  %270 = vmatprep.subr.bf16.mxu0 0
  %271 = vmatpush1.bf16.msra.mxu0 0
  %272 = vmatprep.subr.bf16.mxu0 0
  %273 = vmatpush1.bf16.msra.mxu0 0
  %274 = vmatprep.subr.bf16.mxu0 0
  %275 = vmatpush1.bf16.msra.mxu0 0
  %276 = vmatprep.mubr.bf16.mxu0 0
  %277 = vmatmul.mubr.bf16.gmra.mrb[0].mxu0 %v186
  %v278 = vpop.f32.mrb[0].mxu0
  %v279 = vadd.f32 %v136, %v278
  %v280 = vpop.f32.mrb[0].mxu0
  %v281 = vadd.f32 %v140, %v280
  %v282 = vpop.f32.mrb[0].mxu0
  %v283 = vadd.f32 %v136, %v282
  %v284 = vpop.f32.mrb[0].mxu0
  %v285 = vadd.f32 %v140, %v284
  %286 = vmatprep.mubr.bf16.mxu0 0
  %287 = vmatmul.mubr.bf16.gmra.mrb[0].mxu0 %v189
  %v288 = vpop.f32.mrb[0].mxu0
  %v289 = vadd.f32 %v136, %v288
  %v290 = vpop.f32.mrb[0].mxu0
  %v291 = vadd.f32 %v140, %v290
  %v292 = vpop.f32.mrb[0].mxu0
  %v293 = vadd.f32 %v136, %v292
  %v294 = vpop.f32.mrb[0].mxu0
  %v295 = vadd.f32 %v140, %v294
  %296 = vdwg.mxu0
  %v297 = vxor.u32 %v226, 2147483648
  %v298 = vxor.u32 %v228, 2147483648
  %v299 = vxor.u32 %v230, 2147483648
  %v300 = vxor.u32 %v232, 2147483648
  %v301 = vxor.u32 %v236, 2147483648
  %v302 = vxor.u32 %v238, 2147483648
  %v303 = vxor.u32 %v240, 2147483648
  %v304 = vxor.u32 %v242, 2147483648
  %v305 = vmul.f32 %v297, 1.442695
  %v306 = vpow.pop %v305
  %v307 = vmul.f32 %v298, 1.442695
  %v308 = vpow.pop %v307
  %v309 = vmul.f32 %v299, 1.442695
  %v310 = vpow.pop %v309
  %v311 = vmul.f32 %v300, 1.442695
  %v312 = vpow.pop %v311
  %v313 = vmul.f32 %v301, 1.442695
  %v314 = vpow.pop %v313
  %v315 = vmul.f32 %v302, 1.442695
  %v316 = vpow.pop %v315
  %v317 = vmul.f32 %v303, 1.442695
  %v318 = vpow.pop %v317
  %v319 = vmul.f32 %v304, 1.442695
  %v320 = vpow.pop %v319
  %v321 = vadd.f32 %v306, 1.0
  %v322 = vadd.f32 %v308, 1.0
  %v323 = vadd.f32 %v310, 1.0
  %v324 = vadd.f32 %v312, 1.0
  %v325 = vadd.f32 %v314, 1.0
  %v326 = vadd.f32 %v316, 1.0
  %v327 = vadd.f32 %v318, 1.0
  %v328 = vadd.f32 %v320, 1.0
  %v329 = vrcp.pop %v321
  %v330 = vmul.f32 1.0, %v329
  %v331 = vrcp.pop %v322
  %v332 = vmul.f32 1.0, %v331
  %v333 = vrcp.pop %v323
  %v334 = vmul.f32 1.0, %v333
  %v335 = vrcp.pop %v324
  %v336 = vmul.f32 1.0, %v335
  %v337 = vrcp.pop %v325
  %v338 = vmul.f32 1.0, %v337
  %v339 = vrcp.pop %v326
  %v340 = vmul.f32 1.0, %v339
  %v341 = vrcp.pop %v327
  %v342 = vmul.f32 1.0, %v341
  %v343 = vrcp.pop %v328
  %v344 = vmul.f32 1.0, %v343
  %v345 = vtanh.pop %v279
  %v346 = vtanh.pop %v281
  %v347 = vtanh.pop %v283
  %v348 = vtanh.pop %v285
  %v349 = vtanh.pop %v289
  %v350 = vtanh.pop %v291
  %v351 = vtanh.pop %v293
  %v352 = vtanh.pop %v295
  %v353 = vsub.f32 1.0, %v330
  %v354 = vsub.f32 1.0, %v332
  %v355 = vsub.f32 1.0, %v334
  %v356 = vsub.f32 1.0, %v336
  %v357 = vsub.f32 1.0, %v338
  %v358 = vsub.f32 1.0, %v340
  %v359 = vsub.f32 1.0, %v342
  %v360 = vsub.f32 1.0, %v344
  %v361 = vmul.f32 %v353, %v345
  %v362 = vmul.f32 %v354, %v346
  %v363 = vmul.f32 %v355, %v347
  %v364 = vmul.f32 %v356, %v348
  %v365 = vmul.f32 %v357, %v349
  %v366 = vmul.f32 %v358, %v350
  %v367 = vmul.f32 %v359, %v351
  %v368 = vmul.f32 %v360, %v352
  %v369 = vpack.c.bf16 %v363, %v361
  %v370 = vpack.c.bf16 %v364, %v362
  %v371 = vpack.c.bf16 %v367, %v365
  %v372 = vpack.c.bf16 %v368, %v366
  %v373 = vld [vmem:[%s4] sm:$0xf]
  %v374 = vld [vmem:[%s4 + $0x4] sm:$0xf]
  %v375 = vld [vmem:[%s4 + $0x8] sm:$0xf]
  %v376 = vld [vmem:[%s4 + $0xc] sm:$0xf]
  %v377 = vld [vmem:[%s4 + $0x10] sm:$0xf]
  %v378 = vld [vmem:[%s4 + $0x14] sm:$0xf]
  %v379 = vld [vmem:[%s4 + $0x18] sm:$0xf]
  %v380 = vld [vmem:[%s4 + $0x1c] sm:$0xf]
  %v381 = vld [vmem:[%s4 + $0x20] sm:$0xf]
  %v382 = vld [vmem:[%s4 + $0x24] sm:$0xf]
  %v383 = vld [vmem:[%s4 + $0x28] sm:$0xf]
  %v384 = vld [vmem:[%s4 + $0x2c] sm:$0xf]
  %v385 = vld [vmem:[%s4 + $0x30] sm:$0xf]
  %v386 = vld [vmem:[%s4 + $0x34] sm:$0xf]
  %v387 = vld [vmem:[%s4 + $0x38] sm:$0xf]
  %v388 = vld [vmem:[%s4 + $0x3c] sm:$0xf]
  %v389 = vld [vmem:[%s4 + $0x40] sm:$0xf]
  %v390 = vld [vmem:[%s4 + $0x44] sm:$0xf]
  %v391 = vld [vmem:[%s4 + $0x48] sm:$0xf]
  %v392 = vld [vmem:[%s4 + $0x4c] sm:$0xf]
  %v393 = vld [vmem:[%s4 + $0x50] sm:$0xf]
  %v394 = vld [vmem:[%s4 + $0x54] sm:$0xf]
  %v395 = vld [vmem:[%s4 + $0x58] sm:$0xf]
  %v396 = vld [vmem:[%s4 + $0x5c] sm:$0xf]
  %v397 = vld [vmem:[%s4 + $0x60] sm:$0xf]
  %v398 = vld [vmem:[%s4 + $0x64] sm:$0xf]
  %v399 = vld [vmem:[%s4 + $0x68] sm:$0xf]
  %v400 = vld [vmem:[%s4 + $0x6c] sm:$0xf]
  %v401 = vld [vmem:[%s4 + $0x70] sm:$0xf]
  %v402 = vld [vmem:[%s4 + $0x74] sm:$0xf]
  %v403 = vld [vmem:[%s4 + $0x78] sm:$0xf]
  %v404 = vld [vmem:[%s4 + $0x7c] sm:$0xf]
  %v437 = vunpack.c.l.b16 %v373
  %v438 = vunpack.c.l.b16 %v374
  %v439 = vunpack.c.l.b16 %v375
  %v440 = vunpack.c.l.b16 %v376
  %v441 = vunpack.c.l.b16 %v377
  %v442 = vunpack.c.l.b16 %v378
  %v443 = vunpack.c.l.b16 %v379
  %v444 = vunpack.c.l.b16 %v380
  %v445 = vunpack.c.l.b16 %v381
  %v446 = vunpack.c.l.b16 %v382
  %v447 = vunpack.c.l.b16 %v383
  %v448 = vunpack.c.l.b16 %v384
  %v449 = vunpack.c.l.b16 %v385
  %v450 = vunpack.c.l.b16 %v386
  %v451 = vunpack.c.l.b16 %v387
  %v452 = vunpack.c.l.b16 %v388
  %v453 = vunpack.c.l.b16 %v389
  %v454 = vunpack.c.l.b16 %v390
  %v455 = vunpack.c.l.b16 %v391
  %v456 = vunpack.c.l.b16 %v392
  %v457 = vunpack.c.l.b16 %v393
  %v458 = vunpack.c.l.b16 %v394
  %v459 = vunpack.c.l.b16 %v395
  %v460 = vunpack.c.l.b16 %v396
  %v461 = vunpack.c.l.b16 %v397
  %v462 = vunpack.c.l.b16 %v398
  %v463 = vunpack.c.l.b16 %v399
  %v464 = vunpack.c.l.b16 %v400
  %v465 = vunpack.c.l.b16 %v401
  %v466 = vunpack.c.l.b16 %v402
  %v467 = vunpack.c.l.b16 %v403
  %v468 = vunpack.c.l.b16 %v404
  %v469 = vpack.c.b16 %v438, %v437
  %v470 = vpack.c.b16 %v440, %v439
  %v471 = vpack.c.b16 %v442, %v441
  %v472 = vpack.c.b16 %v444, %v443
  %v473 = vpack.c.b16 %v446, %v445
  %v474 = vpack.c.b16 %v448, %v447
  %v475 = vpack.c.b16 %v450, %v449
  %v476 = vpack.c.b16 %v452, %v451
  %v477 = vpack.c.b16 %v454, %v453
  %v478 = vpack.c.b16 %v456, %v455
  %v479 = vpack.c.b16 %v458, %v457
  %v480 = vpack.c.b16 %v460, %v459
  %v481 = vpack.c.b16 %v462, %v461
  %v482 = vpack.c.b16 %v464, %v463
  %v483 = vpack.c.b16 %v466, %v465
  %v484 = vpack.c.b16 %v468, %v467
  %501 = vmatprep.subr.bf16.mxu0 0
  %502 = vmatpush1.bf16.msra.mxu0 %v469
  %503 = vmatprep.subr.bf16.mxu0 0
  %504 = vmatpush1.bf16.msra.mxu0 %v470
  %505 = vmatprep.subr.bf16.mxu0 0
  %506 = vmatpush1.bf16.msra.mxu0 %v471
  %507 = vmatprep.subr.bf16.mxu0 0
  %508 = vmatpush1.bf16.msra.mxu0 %v472
  %509 = vmatprep.subr.bf16.mxu0 0
  %510 = vmatpush1.bf16.msra.mxu0 %v473
  %511 = vmatprep.subr.bf16.mxu0 0
  %512 = vmatpush1.bf16.msra.mxu0 %v474
  %513 = vmatprep.subr.bf16.mxu0 0
  %514 = vmatpush1.bf16.msra.mxu0 %v475
  %515 = vmatprep.subr.bf16.mxu0 0
  %516 = vmatpush1.bf16.msra.mxu0 %v476
  %517 = vmatprep.subr.bf16.mxu0 0
  %518 = vmatpush1.bf16.msra.mxu0 %v477
  %519 = vmatprep.subr.bf16.mxu0 0
  %520 = vmatpush1.bf16.msra.mxu0 %v478
  %521 = vmatprep.subr.bf16.mxu0 0
  %522 = vmatpush1.bf16.msra.mxu0 %v479
  %523 = vmatprep.subr.bf16.mxu0 0
  %524 = vmatpush1.bf16.msra.mxu0 %v480
  %525 = vmatprep.subr.bf16.mxu0 0
  %526 = vmatpush1.bf16.msra.mxu0 %v481
  %527 = vmatprep.subr.bf16.mxu0 0
  %528 = vmatpush1.bf16.msra.mxu0 %v482
  %529 = vmatprep.subr.bf16.mxu0 0
  %530 = vmatpush1.bf16.msra.mxu0 %v483
  %531 = vmatprep.subr.bf16.mxu0 0
  %532 = vmatpush1.bf16.msra.mxu0 %v484
  %533 = vmatprep.mubr.bf16.mxu0 %v370
  %534 = vmatmul.mubr.bf16.gmra.mrb[0].mxu0 %v369
  %v535 = vpop.f32.mrb[0].mxu0
  %v536 = vadd.f32 0.0, %v535
  %v537 = vpop.f32.mrb[0].mxu0
  %v538 = vpop.f32.mrb[0].mxu0
  %v539 = vadd.f32 0.0, %v538
  %v540 = vpop.f32.mrb[0].mxu0
  %541 = vmatprep.mubr.bf16.mxu0 %v372
  %542 = vmatmul.mubr.bf16.gmra.mrb[0].mxu0 %v371
  %v543 = vpop.f32.mrb[0].mxu0
  %v544 = vadd.f32 0.0, %v543
  %v545 = vpop.f32.mrb[0].mxu0
  %v546 = vpop.f32.mrb[0].mxu0
  %v547 = vadd.f32 0.0, %v546
  %v548 = vpop.f32.mrb[0].mxu0
  %549 = vdwg.mxu0
  %v550 = vmax.f32 %v536, 0.0
  %v551 = vmax.f32 %v539, 0.0
  %v552 = vmax.f32 %v544, 0.0
  %v553 = vmax.f32 %v547, 0.0
  %v554 = vpack.c.bf16 %v551, %v550
  %v555 = vpack.c.bf16 %v553, %v552
  %v556 = vld [vmem:[%s5] sm:$0xf]
  %v557 = vld [vmem:[%s5 + $0x4] sm:$0xf]
  %v558 = vld [vmem:[%s5 + $0x8] sm:$0xf]
  %v559 = vld [vmem:[%s5 + $0xc] sm:$0xf]
  %v560 = vld [vmem:[%s6] sm:$0x1]
  %v562 = vlaneseq
  %v563 = vshrl.u32 %v562, 7
  %v564 = vsub.s32 0, %v563
  %v565 = vrot.slane %v560, %v564
  %v571 = vunpack.c.l.b16 %v556
  %v572 = vunpack.c.l.b16 %v557
  %v573 = vunpack.c.l.b16 %v558
  %v574 = vunpack.c.l.b16 %v559
  %v575 = vpack.c.b16 %v572, %v571
  %v576 = vpack.c.b16 %v574, %v573
  %v580 = vsel %vm57, %v554, 0
  %v583 = vsel %vm57, %v555, 0
  %585 = vmatprep.subr.bf16.mxu0 0
  %586 = vmatpush1.bf16.msra.mxu0 %v575
  %587 = vmatprep.subr.bf16.mxu0 0
  %588 = vmatpush1.bf16.msra.mxu0 %v576
  %589 = vmatprep.subr.bf16.mxu0 0
  %590 = vmatpush1.bf16.msra.mxu0 0
  %591 = vmatprep.subr.bf16.mxu0 0
  %592 = vmatpush1.bf16.msra.mxu0 0
  %593 = vmatprep.subr.bf16.mxu0 0
  %594 = vmatpush1.bf16.msra.mxu0 0
  %595 = vmatprep.subr.bf16.mxu0 0
  %596 = vmatpush1.bf16.msra.mxu0 0
  %597 = vmatprep.subr.bf16.mxu0 0
  %598 = vmatpush1.bf16.msra.mxu0 0
  %599 = vmatprep.subr.bf16.mxu0 0
  %600 = vmatpush1.bf16.msra.mxu0 0
  %601 = vmatprep.subr.bf16.mxu0 0
  %602 = vmatpush1.bf16.msra.mxu0 0
  %603 = vmatprep.subr.bf16.mxu0 0
  %604 = vmatpush1.bf16.msra.mxu0 0
  %605 = vmatprep.subr.bf16.mxu0 0
  %606 = vmatpush1.bf16.msra.mxu0 0
  %607 = vmatprep.subr.bf16.mxu0 0
  %608 = vmatpush1.bf16.msra.mxu0 0
  %609 = vmatprep.subr.bf16.mxu0 0
  %610 = vmatpush1.bf16.msra.mxu0 0
  %611 = vmatprep.subr.bf16.mxu0 0
  %612 = vmatpush1.bf16.msra.mxu0 0
  %613 = vmatprep.subr.bf16.mxu0 0
  %614 = vmatpush1.bf16.msra.mxu0 0
  %615 = vmatprep.subr.bf16.mxu0 0
  %616 = vmatpush1.bf16.msra.mxu0 0
  %617 = vmatprep.mubr.bf16.mxu0 0
  %618 = vmatmul.mubr.bf16.gmra.mrb[0].mxu0 %v580
  %v619 = vpop.f32.mrb[0].mxu0
  %v620 = vadd.f32 %v565, %v619
  %v621 = vpop.f32.mrb[0].mxu0
  %v622 = vpop.f32.mrb[0].mxu0
  %v623 = vadd.f32 %v565, %v622
  %v624 = vpop.f32.mrb[0].mxu0
  %625 = vmatprep.mubr.bf16.mxu0 0
  %626 = vmatmul.mubr.bf16.gmra.mrb[0].mxu0 %v583
  %v627 = vpop.f32.mrb[0].mxu0
  %v628 = vadd.f32 %v565, %v627
  %v629 = vpop.f32.mrb[0].mxu0
  %v630 = vpop.f32.mrb[0].mxu0
  %v631 = vadd.f32 %v565, %v630
  %v632 = vpop.f32.mrb[0].mxu0
  %633 = vdwg.mxu0
  %634 = vst [vmem:[%s7] sm:$0xff] %v620
  %635 = vst [vmem:[%s7 + $0x8] sm:$0xff] %v623
  %636 = vst [vmem:[%s7 + $0x10] sm:$0xff] %v628
  %637 = vst [vmem:[%s7 + $0x18] sm:$0xff] %v631
  // Predicated region
  $region30: #{temporal_gnn_forward.1} parent=0 // pred_check
    _
  $region31: #{temporal_gnn_forward.1} parent=0 // pred_check_branch
    %639 = sbr.rel (0) target = $region33
  $region32: #{temporal_gnn_forward.1} parent=0 // pred_region
    _
  $region33: #{temporal_gnn_forward.1} parent=0 // pred_fallthru
    _
  // Predicated region
  $region34: #{temporal_gnn_forward.1} parent=0 // pred_check
    _
  $region35: #{temporal_gnn_forward.1} parent=0 // pred_check_branch
    %641 = sbr.rel (0) target = $region37
  $region36: #{temporal_gnn_forward.1} parent=0 // pred_region
    _
  $region37: #{temporal_gnn_forward.1} parent=0 // pred_fallthru
    _

</llo_original>
